<compile_context>
chip_gen: v5e
topology: v5e:2x2
jax: 0.10.0
libtpu: 0.0.40
codegen_flags: <defaults>
</compile_context>

<pallas_src>
import functools

import jax
import jax.numpy as jnp
from jax import lax
from jax.experimental import pallas as pl
from jax.experimental.pallas import tpu as pltpu

# Per-input-block VMEM budget (double-buffered by the pipeline => ~2x this for the
# input stream).  Keep at 8 MiB so the stream fits every generation's scoped VMEM
# with headroom (v7x only has 64 MiB physical VMEM per TC).
_BLOCK_BYTES_BUDGET = 8 * 1024 * 1024
_VMEM_LIMIT_BYTES = 40 * 1024 * 1024          # <= ~48 MiB per v7x guidance
_MAX_ROW_TILE = 1024
_MAX_UNROLL_SLICES = 256                      # max statically-unrolled 128-lane slices
_CHUNK_LANE_SLICES = 64                       # chunked path: 64*128 = 8192 lanes/chunk
_MAX_CHUNK_ROWS = 128                         # chunked path: keep f32 acc <= 16 vregs


def _sublane_pack(dtype):
    """Rows per packed sublane group for this dtype (8 f32, 16 bf16, 32 int8/fp8)."""
    return {4: 8, 2: 16, 1: 32}.get(jnp.dtype(dtype).itemsize, 8)


def _round_up(x, m):
    return ((x + m - 1) // m) * m


def _cdiv(a, b):
    return -(-a // b)


def _choose_tiles(n_rows, hw, dtype):
    """Return (row_tile, hw_tile, chunked).

    Preferred path: full-H*W contiguous blocks (hw_tile == hw); shrink row_tile
    (never below the sublane pack) before chunking the reduction axis.  Only when
    even `pack` rows at full H*W exceed the budget do we chunk H*W, and then with a
    fixed 8192-lane chunk (>= 16 KiB contiguous per-row segments) that always fits
    the budget; a partial last chunk is lane-masked inside the kernel.
    """
    itemsize = jnp.dtype(dtype).itemsize
    pack = _sublane_pack(dtype)
    budget_elems = _BLOCK_BYTES_BUDGET // itemsize

    # Row tile: as large as allowed, but leave >= 2 row blocks so the "parallel"
    # row axis can shard across v7x's two TensorCores (neutral on v5e/v6e).
    row_tile = min(_MAX_ROW_TILE, _round_up(n_rows, pack))
    if n_rows >= 2 * pack:
        row_tile = min(row_tile, _round_up(_cdiv(n_rows, 2), pack))

    # Full-H*W blocks (one long unit-stride DMA slab per block).
    if row_tile * hw <= budget_elems:
        return row_tile, hw, False
    rows_fit = (budget_elems // hw // pack) * pack
    if rows_fit >= pack:
        return min(row_tile, rows_fit), hw, False

    # Fallback: H*W so large that even `pack` rows at full H*W exceed the budget.
    hw_tile = _CHUNK_LANE_SLICES * 128
    row_tile = min(_round_up(n_rows, pack), _MAX_CHUNK_ROWS)
    return row_tile, hw_tile, True


def _gap_kernel_full(x_ref, o_ref, *, inv_hw, hw):
    """One full row group per block: mean over the whole lane (H*W) axis."""
    n_full = hw // 128
    rem = hw - n_full * 128

    if 2 <= n_full <= _MAX_UNROLL_SLICES:
        # VPU-only lane-tile accumulation into a (row_tile, 128) f32 value; the
        # cross-lane (XLU) reduce happens exactly once per block.
        acc = x_ref[:, 0:128].astype(jnp.float32)
        for j in range(1, n_full):
            acc = acc + x_ref[:, j * 128:(j + 1) * 128].astype(jnp.float32)
        total = jnp.sum(acc, axis=-1, keepdims=True)
        if rem:
            total = total + jnp.sum(
                x_ref[:, n_full * 128:hw].astype(jnp.float32),
                axis=-1, keepdims=True)
    else:
        # Rows narrower than 2 vregs, or absurdly wide rows where static unrolling
        # would bloat the program: let Mosaic lower the whole-row reduce directly
        # (still a single reduce per block, not per grid step).
        total = jnp.sum(x_ref[...], axis=-1, keepdims=True, dtype=jnp.float32)

    o_ref[...] = (total * inv_hw).astype(o_ref.dtype)


def _gap_kernel_chunked(x_ref, o_ref, acc_ref, *, inv_hw, hw, hw_tile, row_tile):
    """Rare huge-H*W path: accumulate lane-wise (VPU) into a (row_tile, 128) f32
    scratch across the hw grid axis; single cross-lane reduce only at finalize."""
    k = pl.program_id(1)

    @pl.when(k == 0)
    def _init():
        acc_ref[...] = jnp.zeros_like(acc_ref)

    n_slices = hw_tile // 128
    base = k * hw_tile
    lane = lax.broadcasted_iota(jnp.int32, (row_tile, 128), 1)  # hoisted, reused

    acc = acc_ref[...]
    for j in range(n_slices):
        lo = j * 128
        sl = x_ref[:, lo:lo + 128].astype(jnp.float32)
        # Mask lanes past the end of H*W (handles a partial last chunk; also
        # guards against NaN/Inf garbage in the out-of-bounds buffer region).
        valid = (base + lo + lane) < hw
        acc = acc + jnp.where(valid, sl, 0.0)
    acc_ref[...] = acc

    @pl.when(k == pl.num_programs(1) - 1)
    def _finalize():
        o_ref[...] = (jnp.sum(acc_ref[...], axis=-1, keepdims=True)
                      * inv_hw).astype(o_ref.dtype)


@jax.jit
def _global_avg_pool_rows(x2d):
    """x2d: (N, HW) -> (N, 1); per-row mean over HW computed in a Pallas kernel."""
    n_rows, hw = x2d.shape
    row_tile, hw_tile, chunked = _choose_tiles(n_rows, hw, x2d.dtype)
    inv_hw = 1.0 / hw
    out_shape = jax.ShapeDtypeStruct((n_rows, 1), x2d.dtype)

    if not chunked:
        kernel = functools.partial(_gap_kernel_full, inv_hw=inv_hw, hw=hw)
        return pl.pallas_call(
            kernel,
            out_shape=out_shape,
            grid=(pl.cdiv(n_rows, row_tile),),
            in_specs=[pl.BlockSpec((row_tile, hw), lambda i: (i, 0))],
            out_specs=pl.BlockSpec((row_tile, 1), lambda i: (i, 0)),
            compiler_params=pltpu.CompilerParams(
                dimension_semantics=("parallel",),
                vmem_limit_bytes=_VMEM_LIMIT_BYTES,
            ),
        )(x2d)

    kernel = functools.partial(_gap_kernel_chunked, inv_hw=inv_hw, hw=hw,
                               hw_tile=hw_tile, row_tile=row_tile)
    return pl.pallas_call(
        kernel,
        out_shape=out_shape,
        grid=(pl.cdiv(n_rows, row_tile), pl.cdiv(hw, hw_tile)),
        in_specs=[pl.BlockSpec((row_tile, hw_tile), lambda i, k: (i, k))],
        out_specs=pl.BlockSpec((row_tile, 1), lambda i, k: (i, 0)),
        scratch_shapes=[pltpu.VMEM((row_tile, 128), jnp.float32)],
        compiler_params=pltpu.CompilerParams(
            dimension_semantics=("parallel", "arbitrary"),
            vmem_limit_bytes=_VMEM_LIMIT_BYTES,
        ),
    )(x2d)


def my_global_avg_pool_2d(x):
    """Forward pass of MyGlobalAvgPool2d (AdaptiveAvgPool2d(1), global avg pool).

    4D (b, c, h, w)    -> (b, c, 1, 1)
    5D (b, c, n, h, w) -> (b, c, n)
    """
    # TODO(synk): general AdaptiveAvgPool2d(output_size > 1) not implemented; the
    # module's 5D branch (view to (b, c, n)) only makes sense for output_size=1.
    if x.ndim == 4:
        b, c, h, w = x.shape
        out = _global_avg_pool_rows(x.reshape(b * c, h * w))
        return out.reshape(b, c, 1, 1)
    elif x.ndim == 5:
        b, c, n, h, w = x.shape
        out = _global_avg_pool_rows(x.reshape(b * c * n, h * w))
        return out.reshape(b, c, n)
    else:
        # Original module printed and returned None; raise instead so jit tracing
        # never silently produces a None pytree.
        raise ValueError(f"Unsupported input dimension: {x.shape}")


if __name__ == "__main__":
    key = jax.random.PRNGKey(0)
    k4, k5, k6, k7 = jax.random.split(key, 4)

    # 4D case: (batch=2, channels=4, H=16, W=16) -> (2, 4, 1, 1)
    x4 = jax.random.normal(k4, (2, 4, 16, 16), dtype=jnp.float32)
    y4 = jax.block_until_ready(my_global_avg_pool_2d(x4))
    ref4 = jnp.mean(x4, axis=(2, 3), keepdims=True)
    assert y4.shape == (2, 4, 1, 1), y4.shape
    assert jnp.allclose(y4, ref4, atol=1e-5, rtol=1e-5)

    # 5D case: (b=2, c=3, n=4, H=8, W=8) -> (2, 3, 4); exercises >=2 row blocks.
    x5 = jax.random.normal(k5, (2, 3, 4, 8, 8), dtype=jnp.float32)
    y5 = jax.block_until_ready(my_global_avg_pool_2d(x5))
    ref5 = jnp.mean(x5, axis=(3, 4))
    assert y5.shape == (2, 3, 4), y5.shape
    assert jnp.allclose(y5, ref5, atol=1e-5, rtol=1e-5)

    # Ragged rows (b*c = 15, not a multiple of 8) + non-128-multiple H*W (144).
    x6 = jax.random.normal(k6, (3, 5, 12, 12), dtype=jnp.float32)
    y6 = jax.block_until_ready(my_global_avg_pool_2d(x6))
    ref6 = jnp.mean(x6, axis=(2, 3), keepdims=True)
    assert y6.shape == (3, 5, 1, 1), y6.shape
    assert jnp.allclose(y6, ref6, atol=1e-5, rtol=1e-5)

    # bf16 input: f32 accumulation inside the kernel, cast back on store.
    x7 = jax.random.normal(k7, (2, 4, 16, 16), dtype=jnp.bfloat16)
    y7 = jax.block_until_ready(my_global_avg_pool_2d(x7))
    ref7 = jnp.mean(x7.astype(jnp.float32), axis=(2, 3), keepdims=True)
    assert y7.shape == (2, 4, 1, 1), y7.shape
    assert jnp.allclose(y7.astype(jnp.float32), ref7, atol=2e-2, rtol=2e-2)

    print("KERNEL_OK")
</pallas_src>

<mosaic_0001>
module attributes {stable_mosaic.version = 11 : i64} {
  func.func @_gap_kernel_full(%arg0: i32, %arg1: memref<8x256xf32, #tpu.memory_space<vmem>>, %arg2: memref<8x1xf32, #tpu.memory_space<vmem>>) attributes {dimension_semantics = [#tpu.dimension_semantics<parallel>], iteration_bounds = array<i64: 1>, scalar_prefetch = 0 : i64, scratch_operands = 0 : i64, tpu.core_type = #tpu.core_type<tc>, window_params = [{transform_indices = @transform_0, window_bounds = array<i64: 8, 256>}, {transform_indices = @transform_1, window_bounds = array<i64: 8, 1>}]} {
    %c0 = arith.constant 0 : index
    %c0_0 = arith.constant 0 : index
    %0 = vector.load %arg1[%c0, %c0_0] : memref<8x256xf32, #tpu.memory_space<vmem>>, vector<8x128xf32>
    %c0_1 = arith.constant 0 : index
    %c128 = arith.constant 128 : index
    %1 = vector.load %arg1[%c0_1, %c128] : memref<8x256xf32, #tpu.memory_space<vmem>>, vector<8x128xf32>
    %2 = arith.addf %0, %1 : vector<8x128xf32>
    %cst = arith.constant dense<0.000000e+00> : vector<8xf32>
    %3 = vector.multi_reduction <add>, %2, %cst [1] : vector<8x128xf32> to vector<8xf32>
    %4 = vector.shape_cast %3 : vector<8xf32> to vector<8x1xf32>
    %cst_2 = arith.constant 3.906250e-03 : f32
    %5 = vector.broadcast %cst_2 : f32 to vector<8x1xf32>
    %6 = arith.mulf %4, %5 : vector<8x1xf32>
    %c0_3 = arith.constant 0 : index
    %c0_4 = arith.constant 0 : index
    %7 = vector.load %arg2[%c0_3, %c0_4] : memref<8x1xf32, #tpu.memory_space<vmem>>, vector<8x1xf32>
    tpu.vector_store %arg2[%c0_3, %c0_4], %6 {strides = array<i32>} : memref<8x1xf32, #tpu.memory_space<vmem>>, vector<8x1xf32>,
    return
  }
  func.func @transform_0(%arg0: i32) -> (i32, i32) {
    %c0_i32 = arith.constant 0 : i32
    %c0_i32_0 = arith.constant 0 : i32
    return %arg0, %c0_i32 : i32, i32
  }
  func.func @transform_1(%arg0: i32) -> (i32, i32) {
    %c0_i32 = arith.constant 0 : i32
    %c0_i32_0 = arith.constant 0 : i32
    return %arg0, %c0_i32 : i32, i32
  }
}

</mosaic_0001>

<llo_original>
// kernel: _global_avg_pool_rows.1
$region0: #{_global_avg_pool_rows.1}
  #allocation0 [shape = 'u32[]', space=smem, size = 0x4, offset = 0x4, fixed_abs, tag = 'smem constant byte address 0x4 - core index']
  #allocation1 [shape = 'u32[72,128]{1,0:T(1,128)}', space=vmem, size = 0x9000, scoped, tag = 'internal scratch']
  %s0 = inlined_call_operand.hbm [shape: f32[8,256], index: 0, kind: input, shape index: {}]
  %s1 = inlined_call_operand.vmem [shape: f32[8,1], index: 1, kind: output, shape index: {}]
  %s2 = sld [smem:[#allocation0]]
  $region18: #{_global_avg_pool_rows.1} parent=0
    _
  %s4 = ssub.s32 1, %s2
  %s5 = scalar_select 0, %s4, %s2
  $region1: #{_global_avg_pool_rows.1} parent=0
    #allocation2 [shape = 'u8[8192]{0}', space=vmem, size = 0x2000, scoped, tag = 'input window, operand 0, single buffered']
    #allocation3 [shape = 's32[1]{0}', space=sflag, size = 0x4, scoped, tag = 'scoped memory for _global_avg_pool_rows.1']
    %6 = vsyncpa [#allocation3], 0
    // Predicated region
    $region2: #{_global_avg_pool_rows.1} parent=1 // pred_check
      _
    $region3: #{_global_avg_pool_rows.1} parent=1 // pred_check_branch
      %8 = sbr.rel (0) target = $region5
    $region4: #{_global_avg_pool_rows.1} parent=1 // pred_region
      %10 = vsyncadd [#allocation3], 0
      %s12 = sshll.u32 %s0, 4
      %s13 = int_to_ptr.hbm [resolvable:$true] %s12
      %s14 = sshll.u32 [#allocation2], 4
      %s15 = int_to_ptr.vmem [resolvable:$true] %s14
      %17 = dma.hbm_to_vmem [thread:$0]  %s13, 256, %s15, [#allocation3]
    $region5: #{_global_avg_pool_rows.1} parent=1 // pred_fallthru
      _
    // Predicated region
    $region6: #{_global_avg_pool_rows.1} parent=1 // pred_check
      _
    $region7: #{_global_avg_pool_rows.1} parent=1 // pred_check_branch
      %19 = sbr.rel (0) target = $region9
    $region8: #{_global_avg_pool_rows.1} parent=1 // pred_region
      %21 = dma.done [#allocation3], 256
    $region9: #{_global_avg_pool_rows.1} parent=1 // pred_fallthru
      _
    %v22 = vld [vmem:[#allocation2] sm:$0xff]
    %v23 = vld [vmem:[#allocation2 + $0x8] sm:$0xff]
    %v24 = vadd.f32 %v22, %v23
    %25 = vadd.xlane.f32.xlu0 %v24
    %v26 = vpop.xlane.xlu0 %25
    %v27 = vmul.f32 %v26, 0.00390625
    %vm28 = vcmask 7168
    %29 = vst.msk [vmem:[%s1] sm:$0xff] %vm28, %v27
    // Predicated region
    $region10: #{_global_avg_pool_rows.1} parent=1 // pred_check
      _
    $region11: #{_global_avg_pool_rows.1} parent=1 // pred_check_branch
      %31 = sbr.rel (0) target = $region13
    $region12: #{_global_avg_pool_rows.1} parent=1 // pred_region
      _
    $region13: #{_global_avg_pool_rows.1} parent=1 // pred_fallthru
      _
    // Predicated region
    $region14: #{_global_avg_pool_rows.1} parent=1 // pred_check
      _
    $region15: #{_global_avg_pool_rows.1} parent=1 // pred_check_branch
      %33 = sbr.rel (0) target = $region17
    $region16: #{_global_avg_pool_rows.1} parent=1 // pred_region
      _
    $region17: #{_global_avg_pool_rows.1} parent=1 // pred_fallthru
      _
    %34 = vsyncpa [#allocation3], 1

</llo_original>
